<compile_context>
chip_gen: v7x
topology: tpu7x:2x2x1
jax: 0.10.0
libtpu: 0.0.40
codegen_flags: <defaults>
</compile_context>

<pallas_src>
import functools

import jax
import jax.numpy as jnp
from jax import lax
from jax.experimental import pallas as pl
from jax.experimental.pallas import tpu as pltpu

_LANE = 128
_SUBLANE = 8


def _round_up(x, m):
    return (x + m - 1) // m * m


# ----------------------------- Pallas kernel --------------------------------
def _fcn_kernel(x_ref, w_in_ref, b_in_ref, w_hid_ref, b_hid_ref,
                w_out_ref, b_out_ref, o_ref, *, n_hidden_layers):
    # First Linear + Tanh: (TB, Kin_pad) @ (Kin_pad, H_pad) -> (TB, H_pad)
    h = jnp.tanh(
        jnp.dot(x_ref[...], w_in_ref[...], preferred_element_type=jnp.float32)
        + b_in_ref[...]
    )

    # (N_LAYERS - 1) hidden Linear + Tanh blocks.
    if n_hidden_layers > 0:
        def body(l, h):
            return jnp.tanh(
                jnp.dot(h, w_hid_ref[l], preferred_element_type=jnp.float32)
                + b_hid_ref[l]
            )
        h = lax.fori_loop(0, n_hidden_layers, body, h, unroll=True)

    # Final Linear, produced transposed so batch sits on the lane axis:
    #   (Nout_pad, H_pad) . (TB, H_pad)^T -> (Nout_pad, TB)
    out = lax.dot_general(
        w_out_ref[...], h,
        dimension_numbers=(((1,), (1,)), ((), ())),
        preferred_element_type=jnp.float32,
    )
    o_ref[...] = (out + b_out_ref[...]).astype(o_ref.dtype)


# ------------------------------ Wrapper --------------------------------------
def fcn_forward(x, params, *, block_batch=512):
    """x: (B, N_INPUT). params: dict from init_fcn_params. Returns (B, N_OUTPUT)."""
    w_in, b_in = params["w_in"], params["b_in"]        # (n_in, H), (H,)
    w_hid, b_hid = params["w_hid"], params["b_hid"]    # (L-1, H, H), (L-1, H)
    w_out, b_out = params["w_out"], params["b_out"]    # (H, n_out), (n_out,)

    B, n_in = x.shape
    H = w_in.shape[1]
    n_out = w_out.shape[1]
    n_hid = w_hid.shape[0]

    # Padded (lane/sublane friendly) sizes.
    n_in_p = _round_up(max(n_in, 1), _SUBLANE)
    H_p = _round_up(H, _LANE)
    n_out_p = _round_up(n_out, _SUBLANE)

    # Batch tiling: TB multiple of 128 (output lane dim), >=512 for big batches.
    B_p = _round_up(B, _LANE)
    TB = min(block_batch, B_p)
    B_p = _round_up(B_p, TB)
    grid = (B_p // TB,)

    # Zero-pad operands on the host side (exact: padded weights/biases are 0).
    xp = jnp.pad(x.astype(jnp.float32), ((0, B_p - B), (0, n_in_p - n_in)))
    w_in_p = jnp.pad(w_in, ((0, n_in_p - n_in), (0, H_p - H)))
    b_in_p = jnp.pad(b_in.reshape(1, H), ((0, 0), (0, H_p - H)))

    if n_hid > 0:
        w_hid_p = jnp.pad(w_hid, ((0, 0), (0, H_p - H), (0, H_p - H)))
        b_hid_p = jnp.pad(b_hid.reshape(n_hid, 1, H), ((0, 0), (0, 0), (0, H_p - H)))
    else:
        # Never pass a zero-sized operand into pallas_call; dummy never read.
        w_hid_p = jnp.zeros((1, H_p, H_p), jnp.float32)
        b_hid_p = jnp.zeros((1, 1, H_p), jnp.float32)
    n_stack = w_hid_p.shape[0]

    # Output weight stored transposed: (n_out_p, H_p); bias as (n_out_p, 1).
    w_out_p = jnp.pad(w_out.T, ((0, n_out_p - n_out), (0, H_p - H)))
    b_out_p = jnp.pad(b_out.reshape(n_out, 1), ((0, n_out_p - n_out), (0, 0)))

    kernel = functools.partial(_fcn_kernel, n_hidden_layers=n_hid)

    out_p = pl.pallas_call(
        kernel,
        out_shape=jax.ShapeDtypeStruct((n_out_p, B_p), jnp.float32),
        grid=grid,
        in_specs=[
            pl.BlockSpec((TB, n_in_p), lambda i: (i, 0)),            # x (streamed)
            pl.BlockSpec((n_in_p, H_p), lambda i: (0, 0)),           # w_in (resident)
            pl.BlockSpec((1, H_p), lambda i: (0, 0)),                # b_in
            pl.BlockSpec((n_stack, H_p, H_p), lambda i: (0, 0, 0)),  # w_hid (stacked)
            pl.BlockSpec((n_stack, 1, H_p), lambda i: (0, 0, 0)),    # b_hid (stacked)
            pl.BlockSpec((n_out_p, H_p), lambda i: (0, 0)),          # w_out (transposed)
            pl.BlockSpec((n_out_p, 1), lambda i: (0, 0)),            # b_out
        ],
        out_specs=pl.BlockSpec((n_out_p, TB), lambda i: (0, i)),     # lane-dense out
        compiler_params=pltpu.CompilerParams(
            dimension_semantics=("parallel",),
            vmem_limit_bytes=32 * 1024 * 1024,
        ),
    )(xp, w_in_p, b_in_p, w_hid_p, b_hid_p, w_out_p, b_out_p)

    # (n_out_p, B_p) -> (B, n_out)
    return out_p[:n_out, :B].T


# --------------------------- Parameter init ----------------------------------
def init_fcn_params(key, n_input, n_output, n_hidden, n_layers):
    """torch.nn.Linear-style U(-1/sqrt(fan_in), 1/sqrt(fan_in)) init.

    Weights stored as (in_features, out_features); biases as (out_features,)."""
    def linear(key, fan_in, fan_out):
        kw, kb = jax.random.split(key)
        bound = 1.0 / jnp.sqrt(jnp.float32(fan_in))
        w = jax.random.uniform(kw, (fan_in, fan_out), jnp.float32, -bound, bound)
        b = jax.random.uniform(kb, (fan_out,), jnp.float32, -bound, bound)
        return w, b

    keys = jax.random.split(key, n_layers + 1)
    w_in, b_in = linear(keys[0], n_input, n_hidden)

    hid_w, hid_b = [], []
    for i in range(n_layers - 1):
        w, b = linear(keys[1 + i], n_hidden, n_hidden)
        hid_w.append(w)
        hid_b.append(b)
    if n_layers - 1 > 0:
        w_hid = jnp.stack(hid_w)                              # (L-1, H, H)
        b_hid = jnp.stack(hid_b)                              # (L-1, H)
    else:
        w_hid = jnp.zeros((0, n_hidden, n_hidden), jnp.float32)
        b_hid = jnp.zeros((0, n_hidden), jnp.float32)

    w_out, b_out = linear(keys[n_layers], n_hidden, n_output)

    return {
        "w_in": w_in, "b_in": b_in,
        "w_hid": w_hid, "b_hid": b_hid,
        "w_out": w_out, "b_out": b_out,
    }


# Pure-JAX reference for correctness checking
def fcn_reference(x, params):
    h = jnp.tanh(x @ params["w_in"] + params["b_in"])
    for l in range(params["w_hid"].shape[0]):
        h = jnp.tanh(h @ params["w_hid"][l] + params["b_hid"][l])
    return h @ params["w_out"] + params["b_out"]


# --------------------------------- Main ---------------------------------------
if __name__ == "__main__":
    # Small PINN-style configuration
    N_INPUT, N_OUTPUT, N_HIDDEN, N_LAYERS = 2, 1, 32, 3
    BATCH = 8

    key = jax.random.PRNGKey(0)
    kx, kp = jax.random.split(key)

    x = jax.random.normal(kx, (BATCH, N_INPUT), dtype=jnp.float32)
    params = init_fcn_params(kp, N_INPUT, N_OUTPUT, N_HIDDEN, N_LAYERS)

    out = fcn_forward(x, params)
    out = jax.block_until_ready(out)

    ref = fcn_reference(x, params)
    assert out.shape == (BATCH, N_OUTPUT), out.shape
    assert jnp.allclose(out, ref, atol=1e-5, rtol=1e-5), (out, ref)

    print("KERNEL_OK")
</pallas_src>

<mosaic_0001>
module attributes {stable_mosaic.version = 11 : i64} {
  func.func @_fcn_kernel(%arg0: i32, %arg1: memref<128x8xf32, #tpu.memory_space<vmem>>, %arg2: memref<8x128xf32, #tpu.memory_space<vmem>>, %arg3: memref<1x128xf32, #tpu.memory_space<vmem>>, %arg4: memref<2x128x128xf32, #tpu.memory_space<vmem>>, %arg5: memref<2x1x128xf32, #tpu.memory_space<vmem>>, %arg6: memref<8x128xf32, #tpu.memory_space<vmem>>, %arg7: memref<8x1xf32, #tpu.memory_space<vmem>>, %arg8: memref<8x128xf32, #tpu.memory_space<vmem>>) attributes {dimension_semantics = [#tpu.dimension_semantics<parallel>], iteration_bounds = array<i64: 1>, scalar_prefetch = 0 : i64, scratch_operands = 0 : i64, tpu.core_type = #tpu.core_type<tc>, window_params = [{transform_indices = @transform_0, window_bounds = array<i64: 128, 8>}, {pipeline_mode = #tpu.pipeline_mode<synchronous>, transform_indices = @transform_1, window_bounds = array<i64: 8, 128>}, {pipeline_mode = #tpu.pipeline_mode<synchronous>, transform_indices = @transform_2, window_bounds = array<i64: 1, 128>}, {pipeline_mode = #tpu.pipeline_mode<synchronous>, transform_indices = @transform_3, window_bounds = array<i64: 2, 128, 128>}, {pipeline_mode = #tpu.pipeline_mode<synchronous>, transform_indices = @transform_4, window_bounds = array<i64: 2, 1, 128>}, {pipeline_mode = #tpu.pipeline_mode<synchronous>, transform_indices = @transform_5, window_bounds = array<i64: 8, 128>}, {pipeline_mode = #tpu.pipeline_mode<synchronous>, transform_indices = @transform_6, window_bounds = array<i64: 8, 1>}, {transform_indices = @transform_7, window_bounds = array<i64: 8, 128>}]} {
    %c0 = arith.constant 0 : index
    %c0_0 = arith.constant 0 : index
    %0 = vector.load %arg1[%c0, %c0_0] : memref<128x8xf32, #tpu.memory_space<vmem>>, vector<128x8xf32>
    %c0_1 = arith.constant 0 : index
    %c0_2 = arith.constant 0 : index
    %1 = vector.load %arg2[%c0_1, %c0_2] : memref<8x128xf32, #tpu.memory_space<vmem>>, vector<8x128xf32>
    %cst = arith.constant dense<0.000000e+00> : vector<128x128xf32>
    %2 = tpu.matmul %0, %1, %cst {dimension_numbers = #tpu.dot_dimension_numbers<[1], [0], [0], [1], [0, 0, 1, 1], [], []>} : vector<128x8xf32>, vector<8x128xf32>, vector<128x128xf32> -> vector<128x128xf32>
    %c0_3 = arith.constant 0 : index
    %c0_4 = arith.constant 0 : index
    %3 = vector.load %arg3[%c0_3, %c0_4] : memref<1x128xf32, #tpu.memory_space<vmem>>, vector<1x128xf32>
    %4 = vector.broadcast %3 : vector<1x128xf32> to vector<128x128xf32>
    %5 = arith.addf %2, %4 : vector<128x128xf32>
    %6 = math.tanh %5 : vector<128x128xf32>
    %c0_i32 = arith.constant 0 : i32
    %7 = arith.index_cast %c0_i32 : i32 to index
    %c0_5 = arith.constant 0 : index
    %c0_6 = arith.constant 0 : index
    %8 = vector.load %arg4[%7, %c0_5, %c0_6] : memref<2x128x128xf32, #tpu.memory_space<vmem>>, vector<1x128x128xf32>
    %9 = vector.shape_cast %8 : vector<1x128x128xf32> to vector<128x128xf32>
    %cst_7 = arith.constant dense<0.000000e+00> : vector<128x128xf32>
    %10 = tpu.matmul %6, %9, %cst_7 {dimension_numbers = #tpu.dot_dimension_numbers<[1], [0], [0], [1], [0, 0, 1, 1], [], []>} : vector<128x128xf32>, vector<128x128xf32>, vector<128x128xf32> -> vector<128x128xf32>
    %11 = arith.index_cast %c0_i32 : i32 to index
    %c0_8 = arith.constant 0 : index
    %c0_9 = arith.constant 0 : index
    %12 = vector.load %arg5[%11, %c0_8, %c0_9] : memref<2x1x128xf32, #tpu.memory_space<vmem>>, vector<1x1x128xf32>
    %13 = vector.shape_cast %12 : vector<1x1x128xf32> to vector<1x128xf32>
    %14 = vector.broadcast %13 : vector<1x128xf32> to vector<128x128xf32>
    %15 = arith.addf %10, %14 : vector<128x128xf32>
    %16 = math.tanh %15 : vector<128x128xf32>
    %c1_i32 = arith.constant 1 : i32
    %17 = arith.index_cast %c1_i32 : i32 to index
    %c0_10 = arith.constant 0 : index
    %c0_11 = arith.constant 0 : index
    %18 = vector.load %arg4[%17, %c0_10, %c0_11] : memref<2x128x128xf32, #tpu.memory_space<vmem>>, vector<1x128x128xf32>
    %19 = vector.shape_cast %18 : vector<1x128x128xf32> to vector<128x128xf32>
    %cst_12 = arith.constant dense<0.000000e+00> : vector<128x128xf32>
    %20 = tpu.matmul %16, %19, %cst_12 {dimension_numbers = #tpu.dot_dimension_numbers<[1], [0], [0], [1], [0, 0, 1, 1], [], []>} : vector<128x128xf32>, vector<128x128xf32>, vector<128x128xf32> -> vector<128x128xf32>
    %21 = arith.index_cast %c1_i32 : i32 to index
    %c0_13 = arith.constant 0 : index
    %c0_14 = arith.constant 0 : index
    %22 = vector.load %arg5[%21, %c0_13, %c0_14] : memref<2x1x128xf32, #tpu.memory_space<vmem>>, vector<1x1x128xf32>
    %23 = vector.shape_cast %22 : vector<1x1x128xf32> to vector<1x128xf32>
    %24 = vector.broadcast %23 : vector<1x128xf32> to vector<128x128xf32>
    %25 = arith.addf %20, %24 : vector<128x128xf32>
    %26 = math.tanh %25 : vector<128x128xf32>
    %c2_i32 = arith.constant 2 : i32
    %c0_15 = arith.constant 0 : index
    %c0_16 = arith.constant 0 : index
    %27 = vector.load %arg6[%c0_15, %c0_16] : memref<8x128xf32, #tpu.memory_space<vmem>>, vector<8x128xf32>
    %cst_17 = arith.constant dense<0.000000e+00> : vector<8x128xf32>
    %28 = tpu.matmul %27, %26, %cst_17 {dimension_numbers = #tpu.dot_dimension_numbers<[1], [1], [0], [0], [0, 0, 1, 0], [], []>} : vector<8x128xf32>, vector<128x128xf32>, vector<8x128xf32> -> vector<8x128xf32>
    %c0_18 = arith.constant 0 : index
    %c0_19 = arith.constant 0 : index
    %29 = vector.load %arg7[%c0_18, %c0_19] : memref<8x1xf32, #tpu.memory_space<vmem>>, vector<8x1xf32>
    %30 = vector.broadcast %29 : vector<8x1xf32> to vector<8x128xf32>
    %31 = arith.addf %28, %30 : vector<8x128xf32>
    %c0_20 = arith.constant 0 : index
    %c0_21 = arith.constant 0 : index
    %32 = vector.load %arg8[%c0_20, %c0_21] : memref<8x128xf32, #tpu.memory_space<vmem>>, vector<8x128xf32>
    tpu.vector_store %arg8[%c0_20, %c0_21], %31 {strides = array<i32>} : memref<8x128xf32, #tpu.memory_space<vmem>>, vector<8x128xf32>,
    return
  }
  func.func @transform_0(%arg0: i32) -> (i32, i32) {
    %c0_i32 = arith.constant 0 : i32
    %c0_i32_0 = arith.constant 0 : i32
    return %arg0, %c0_i32 : i32, i32
  }
  func.func @transform_1(%arg0: i32) -> (i32, i32) {
    %c0_i32 = arith.constant 0 : i32
    %c0_i32_0 = arith.constant 0 : i32
    %c0_i32_1 = arith.constant 0 : i32
    return %c0_i32, %c0_i32_0 : i32, i32
  }
  func.func @transform_2(%arg0: i32) -> (i32, i32) {
    %c0_i32 = arith.constant 0 : i32
    %c0_i32_0 = arith.constant 0 : i32
    %c0_i32_1 = arith.constant 0 : i32
    return %c0_i32, %c0_i32_0 : i32, i32
  }
  func.func @transform_3(%arg0: i32) -> (i32, i32, i32) {
    %c0_i32 = arith.constant 0 : i32
    %c0_i32_0 = arith.constant 0 : i32
    %c0_i32_1 = arith.constant 0 : i32
    %c0_i32_2 = arith.constant 0 : i32
    return %c0_i32, %c0_i32_0, %c0_i32_1 : i32, i32, i32
  }
  func.func @transform_4(%arg0: i32) -> (i32, i32, i32) {
    %c0_i32 = arith.constant 0 : i32
    %c0_i32_0 = arith.constant 0 : i32
    %c0_i32_1 = arith.constant 0 : i32
    %c0_i32_2 = arith.constant 0 : i32
    return %c0_i32, %c0_i32_0, %c0_i32_1 : i32, i32, i32
  }
  func.func @transform_5(%arg0: i32) -> (i32, i32) {
    %c0_i32 = arith.constant 0 : i32
    %c0_i32_0 = arith.constant 0 : i32
    %c0_i32_1 = arith.constant 0 : i32
    return %c0_i32, %c0_i32_0 : i32, i32
  }
  func.func @transform_6(%arg0: i32) -> (i32, i32) {
    %c0_i32 = arith.constant 0 : i32
    %c0_i32_0 = arith.constant 0 : i32
    %c0_i32_1 = arith.constant 0 : i32
    return %c0_i32, %c0_i32_0 : i32, i32
  }
  func.func @transform_7(%arg0: i32) -> (i32, i32) {
    %c0_i32 = arith.constant 0 : i32
    %c0_i32_0 = arith.constant 0 : i32
    return %c0_i32, %arg0 : i32, i32
  }
}

</mosaic_0001>

<llo_original>
// kernel: tpu_custom_call.1
$region0: #{tpu_custom_call.1}
  #allocation0 [shape = 'u32[]', space=smem, size = 0x4, offset = 0x4, fixed_abs, tag = 'smem constant byte address 0x4 - core index']
  #allocation1 [shape = 'u32[144,128]{1,0:T(1,128)}', space=vmem, size = 0x12000, scoped, tag = 'internal scratch']
  %s0 = inlined_call_operand.vmem [shape: f32[128,8], index: 0, kind: input, shape index: {}]
  %s1 = inlined_call_operand.vmem [shape: f32[8,128], index: 1, kind: input, shape index: {}]
  %s2 = inlined_call_operand.vmem [shape: f32[1,128], index: 2, kind: input, shape index: {}]
  %s3 = inlined_call_operand.hbm [shape: f32[2,128,128], index: 3, kind: input, shape index: {}]
  %s4 = inlined_call_operand.vmem [shape: f32[2,1,128], index: 4, kind: input, shape index: {}]
  %s5 = inlined_call_operand.vmem [shape: f32[8,128], index: 5, kind: input, shape index: {}]
  %s6 = inlined_call_operand.vmem [shape: f32[8,1], index: 6, kind: input, shape index: {}]
  %s7 = inlined_call_operand.hbm [shape: f32[8,128], index: 7, kind: output, shape index: {}]
  %s8 = sld [smem:[#allocation0]]
  $region42: #{tpu_custom_call.1} parent=0
    _
  %s10 = ssub.s32 1, %s8
  %s11 = scalar_select 0, %s10, %s8
  $region1: #{tpu_custom_call.1} parent=0
    #allocation2 [shape = 'u8[131072]{0}', space=vmem, size = 0x20000, scoped, tag = 'input window, operand 3, single buffered']
    #allocation3 [shape = 's32[1]{0}', space=sflag, size = 0x4, scoped, tag = 'scoped memory for tpu_custom_call.1']
    #allocation4 [shape = 's32[1]{0}', space=sflag, size = 0x4, scoped, tag = 'scoped memory for tpu_custom_call.1']
    #allocation5 [shape = 'u8[4096]{0}', space=vmem, size = 0x1000, scoped, tag = 'output window, operand 0, single buffered']
    %12 = vsyncpa [#allocation3], 0
    %13 = vsyncpa [#allocation4], 0
    // Predicated region
    $region2: #{tpu_custom_call.1} parent=1 // pred_check
      _
    $region3: #{tpu_custom_call.1} parent=1 // pred_check_branch
      %15 = sbr.rel (0) target = $region5
    $region4: #{tpu_custom_call.1} parent=1 // pred_region
      _
    $region5: #{tpu_custom_call.1} parent=1 // pred_fallthru
      _
    // Predicated region
    $region6: #{tpu_custom_call.1} parent=1 // pred_check
      _
    $region7: #{tpu_custom_call.1} parent=1 // pred_check_branch
      %17 = sbr.rel (0) target = $region9
    $region8: #{tpu_custom_call.1} parent=1 // pred_region
      _
    $region9: #{tpu_custom_call.1} parent=1 // pred_fallthru
      _
    // Predicated region
    $region10: #{tpu_custom_call.1} parent=1 // pred_check
      _
    $region11: #{tpu_custom_call.1} parent=1 // pred_check_branch
      %19 = sbr.rel (0) target = $region13
    $region12: #{tpu_custom_call.1} parent=1 // pred_region
      _
    $region13: #{tpu_custom_call.1} parent=1 // pred_fallthru
      _
    // Predicated region
    $region14: #{tpu_custom_call.1} parent=1 // pred_check
      _
    $region15: #{tpu_custom_call.1} parent=1 // pred_check_branch
      %21 = sbr.rel (0) target = $region17
    $region16: #{tpu_custom_call.1} parent=1 // pred_region
      %s23 = ssub.s32 4096, 4096
      %24 = vsyncadd [#allocation3], %s23
      %s25 = sshll.u32 [#allocation2], 4
      %s26 = int_to_ptr.vmem [resolvable:$true] %s25
      %31 = dma.hbm_to_vmem [thread:$0]  %s3, 4096, %s26, [#allocation3], 128, 128, 8
    $region17: #{tpu_custom_call.1} parent=1 // pred_fallthru
      _
    // Predicated region
    $region18: #{tpu_custom_call.1} parent=1 // pred_check
      _
    $region19: #{tpu_custom_call.1} parent=1 // pred_check_branch
      %33 = sbr.rel (0) target = $region21
    $region20: #{tpu_custom_call.1} parent=1 // pred_region
      _
    $region21: #{tpu_custom_call.1} parent=1 // pred_fallthru
      _
    // Predicated region
    $region22: #{tpu_custom_call.1} parent=1 // pred_check
      _
    $region23: #{tpu_custom_call.1} parent=1 // pred_check_branch
      %35 = sbr.rel (0) target = $region25
    $region24: #{tpu_custom_call.1} parent=1 // pred_region
      _
    $region25: #{tpu_custom_call.1} parent=1 // pred_fallthru
      _
    // Predicated region
    $region26: #{tpu_custom_call.1} parent=1 // pred_check
      _
    $region27: #{tpu_custom_call.1} parent=1 // pred_check_branch
      %37 = sbr.rel (0) target = $region29
    $region28: #{tpu_custom_call.1} parent=1 // pred_region
      _
    $region29: #{tpu_custom_call.1} parent=1 // pred_fallthru
      _
    // Predicated region
    $region30: #{tpu_custom_call.1} parent=1 // pred_check
      _
    $region31: #{tpu_custom_call.1} parent=1 // pred_check_branch
      %39 = sbr.rel (0) target = $region33
    $region32: #{tpu_custom_call.1} parent=1 // pred_region
      %40 = dma.done [#allocation3], 4096
    $region33: #{tpu_custom_call.1} parent=1 // pred_fallthru
      _
    %v41 = vld [vmem:[%s0] sm:$0xff]
    %v42 = vld [vmem:[%s0 + $0x8] sm:$0xff]
    %v43 = vld [vmem:[%s0 + $0x10] sm:$0xff]
    %v44 = vld [vmem:[%s0 + $0x18] sm:$0xff]
    %v45 = vld [vmem:[%s0 + $0x20] sm:$0xff]
    %v46 = vld [vmem:[%s0 + $0x28] sm:$0xff]
    %v47 = vld [vmem:[%s0 + $0x30] sm:$0xff]
    %v48 = vld [vmem:[%s0 + $0x38] sm:$0xff]
    %v49 = vld [vmem:[%s0 + $0x40] sm:$0xff]
    %v50 = vld [vmem:[%s0 + $0x48] sm:$0xff]
    %v51 = vld [vmem:[%s0 + $0x50] sm:$0xff]
    %v52 = vld [vmem:[%s0 + $0x58] sm:$0xff]
    %v53 = vld [vmem:[%s0 + $0x60] sm:$0xff]
    %v54 = vld [vmem:[%s0 + $0x68] sm:$0xff]
    %v55 = vld [vmem:[%s0 + $0x70] sm:$0xff]
    %v56 = vld [vmem:[%s0 + $0x78] sm:$0xff]
    %v57 = vld [vmem:[%s1] sm:$0xff]
    %v58 = vld [vmem:[%s2] sm:$0x1]
    %v60 = vlaneseq
    %v61 = vshrl.u32 %v60, 7
    %v62 = vsub.s32 0, %v61
    %v63 = vrot.slane %v58, %v62
    %vm65 = vcmask 64512
    %v67 = vsel %vm65, %v41, 0
    %v70 = vsel %vm65, %v42, 0
    %v73 = vsel %vm65, %v43, 0
    %v76 = vsel %vm65, %v44, 0
    %v79 = vsel %vm65, %v45, 0
    %v82 = vsel %vm65, %v46, 0
    %v85 = vsel %vm65, %v47, 0
    %v88 = vsel %vm65, %v48, 0
    %v91 = vsel %vm65, %v49, 0
    %v94 = vsel %vm65, %v50, 0
    %v97 = vsel %vm65, %v51, 0
    %v100 = vsel %vm65, %v52, 0
    %v103 = vsel %vm65, %v53, 0
    %v106 = vsel %vm65, %v54, 0
    %v109 = vsel %vm65, %v55, 0
    %v112 = vsel %vm65, %v56, 0
    %114 = vmatprep.subr.mxu0 0.0
    %115 = vmatpush1.msra.mxu0 %v57
    %116 = vmatprep.subr.mxu0 0.0
    %117 = vmatpush1.msra.mxu0 0.0
    %118 = vmatprep.subr.mxu0 0.0
    %119 = vmatpush1.msra.mxu0 0.0
    %120 = vmatprep.subr.mxu0 0.0
    %121 = vmatpush1.msra.mxu0 0.0
    %122 = vmatprep.subr.mxu0 0.0
    %123 = vmatpush1.msra.mxu0 0.0
    %124 = vmatprep.subr.mxu0 0.0
    %125 = vmatpush1.msra.mxu0 0.0
    %126 = vmatprep.subr.mxu0 0.0
    %127 = vmatpush1.msra.mxu0 0.0
    %128 = vmatprep.subr.mxu0 0.0
    %129 = vmatpush1.msra.mxu0 0.0
    %130 = vmatprep.subr.mxu0 0.0
    %131 = vmatpush1.msra.mxu0 0.0
    %132 = vmatprep.subr.mxu0 0.0
    %133 = vmatpush1.msra.mxu0 0.0
    %134 = vmatprep.subr.mxu0 0.0
    %135 = vmatpush1.msra.mxu0 0.0
    %136 = vmatprep.subr.mxu0 0.0
    %137 = vmatpush1.msra.mxu0 0.0
    %138 = vmatprep.subr.mxu0 0.0
    %139 = vmatpush1.msra.mxu0 0.0
    %140 = vmatprep.subr.mxu0 0.0
    %141 = vmatpush1.msra.mxu0 0.0
    %142 = vmatprep.subr.mxu0 0.0
    %143 = vmatpush1.msra.mxu0 0.0
    %144 = vmatprep.subr.mxu0 0.0
    %145 = vmatpush1.msra.mxu0 0.0
    %146 = vmatprep.subr.mxu0 0.0
    %147 = vmatpush1.msra.mxu0 0.0
    %148 = vmatprep.subr.mxu0 0.0
    %149 = vmatpush1.msra.mxu0 0.0
    %150 = vmatprep.subr.mxu0 0.0
    %151 = vmatpush1.msra.mxu0 0.0
    %152 = vmatprep.subr.mxu0 0.0
    %153 = vmatpush1.msra.mxu0 0.0
    %154 = vmatprep.subr.mxu0 0.0
    %155 = vmatpush1.msra.mxu0 0.0
    %156 = vmatprep.subr.mxu0 0.0
    %157 = vmatpush1.msra.mxu0 0.0
    %158 = vmatprep.subr.mxu0 0.0
    %159 = vmatpush1.msra.mxu0 0.0
    %160 = vmatprep.subr.mxu0 0.0
    %161 = vmatpush1.msra.mxu0 0.0
    %162 = vmatprep.subr.mxu0 0.0
    %163 = vmatpush1.msra.mxu0 0.0
    %164 = vmatprep.subr.mxu0 0.0
    %165 = vmatpush1.msra.mxu0 0.0
    %166 = vmatprep.subr.mxu0 0.0
    %167 = vmatpush1.msra.mxu0 0.0
    %168 = vmatprep.subr.mxu0 0.0
    %169 = vmatpush1.msra.mxu0 0.0
    %170 = vmatprep.subr.mxu0 0.0
    %171 = vmatpush1.msra.mxu0 0.0
    %172 = vmatprep.subr.mxu0 0.0
    %173 = vmatpush1.msra.mxu0 0.0
    %174 = vmatprep.subr.mxu0 0.0
    %175 = vmatpush1.msra.mxu0 0.0
    %176 = vmatprep.subr.mxu0 0.0
    %177 = vmatpush1.msra.mxu0 0.0
    %178 = vmatprep.mubr.f32.mxu0 0.0
    %179 = vmatmul.mubr.f32.gmra.mrb[0].mxu0 %v67
    %v180 = vpop.f32.mrb[0].mxu0
    %v181 = vadd.f32 %v63, %v180
    %v182 = vpop.f32.mrb[0].mxu0
    %183 = vmatprep.mubr.f32.mxu0 0.0
    %184 = vmatmul.mubr.f32.gmra.mrb[0].mxu0 %v70
    %v185 = vpop.f32.mrb[0].mxu0
    %v186 = vadd.f32 %v63, %v185
    %v187 = vpop.f32.mrb[0].mxu0
    %188 = vmatprep.mubr.f32.mxu0 0.0
    %189 = vmatmul.mubr.f32.gmra.mrb[0].mxu0 %v73
    %v190 = vpop.f32.mrb[0].mxu0
    %v191 = vadd.f32 %v63, %v190
    %v192 = vpop.f32.mrb[0].mxu0
    %193 = vmatprep.mubr.f32.mxu0 0.0
    %194 = vmatmul.mubr.f32.gmra.mrb[0].mxu0 %v76
    %v195 = vpop.f32.mrb[0].mxu0
    %v196 = vadd.f32 %v63, %v195
    %v197 = vpop.f32.mrb[0].mxu0
    %198 = vmatprep.mubr.f32.mxu0 0.0
    %199 = vmatmul.mubr.f32.gmra.mrb[0].mxu0 %v79
    %v200 = vpop.f32.mrb[0].mxu0
    %v201 = vadd.f32 %v63, %v200
    %v202 = vpop.f32.mrb[0].mxu0
    %203 = vmatprep.mubr.f32.mxu0 0.0
    %204 = vmatmul.mubr.f32.gmra.mrb[0].mxu0 %v82
    %v205 = vpop.f32.mrb[0].mxu0
    %v206 = vadd.f32 %v63, %v205
    %v207 = vpop.f32.mrb[0].mxu0
    %208 = vmatprep.mubr.f32.mxu0 0.0
    %209 = vmatmul.mubr.f32.gmra.mrb[0].mxu0 %v85
    %v210 = vpop.f32.mrb[0].mxu0
    %v211 = vadd.f32 %v63, %v210
    %v212 = vpop.f32.mrb[0].mxu0
    %213 = vmatprep.mubr.f32.mxu0 0.0
    %214 = vmatmul.mubr.f32.gmra.mrb[0].mxu0 %v88
    %v215 = vpop.f32.mrb[0].mxu0
    %v216 = vadd.f32 %v63, %v215
    %v217 = vpop.f32.mrb[0].mxu0
    %218 = vmatprep.mubr.f32.mxu0 0.0
    %219 = vmatmul.mubr.f32.gmra.mrb[0].mxu0 %v91
    %v220 = vpop.f32.mrb[0].mxu0
    %v221 = vadd.f32 %v63, %v220
    %v222 = vpop.f32.mrb[0].mxu0
    %223 = vmatprep.mubr.f32.mxu0 0.0
    %224 = vmatmul.mubr.f32.gmra.mrb[0].mxu0 %v94
    %v225 = vpop.f32.mrb[0].mxu0
    %v226 = vadd.f32 %v63, %v225
    %v227 = vpop.f32.mrb[0].mxu0
    %228 = vmatprep.mubr.f32.mxu0 0.0
    %229 = vmatmul.mubr.f32.gmra.mrb[0].mxu0 %v97
    %v230 = vpop.f32.mrb[0].mxu0
    %v231 = vadd.f32 %v63, %v230
    %v232 = vpop.f32.mrb[0].mxu0
    %233 = vmatprep.mubr.f32.mxu0 0.0
    %234 = vmatmul.mubr.f32.gmra.mrb[0].mxu0 %v100
    %v235 = vpop.f32.mrb[0].mxu0
    %v236 = vadd.f32 %v63, %v235
    %v237 = vpop.f32.mrb[0].mxu0
    %238 = vmatprep.mubr.f32.mxu0 0.0
    %239 = vmatmul.mubr.f32.gmra.mrb[0].mxu0 %v103
    %v240 = vpop.f32.mrb[0].mxu0
    %v241 = vadd.f32 %v63, %v240
    %v242 = vpop.f32.mrb[0].mxu0
    %243 = vmatprep.mubr.f32.mxu0 0.0
    %244 = vmatmul.mubr.f32.gmra.mrb[0].mxu0 %v106
    %v245 = vpop.f32.mrb[0].mxu0
    %v246 = vadd.f32 %v63, %v245
    %v247 = vpop.f32.mrb[0].mxu0
    %248 = vmatprep.mubr.f32.mxu0 0.0
    %249 = vmatmul.mubr.f32.gmra.mrb[0].mxu0 %v109
    %v250 = vpop.f32.mrb[0].mxu0
    %v251 = vadd.f32 %v63, %v250
    %v252 = vpop.f32.mrb[0].mxu0
    %253 = vmatprep.mubr.f32.mxu0 0.0
    %254 = vmatmul.mubr.f32.gmra.mrb[0].mxu0 %v112
    %v255 = vpop.f32.mrb[0].mxu0
    %v256 = vadd.f32 %v63, %v255
    %v257 = vpop.f32.mrb[0].mxu0
    %258 = vdwg.mxu0
    %v259 = vtanh.pop %v181
    %v260 = vtanh.pop %v186
    %v261 = vtanh.pop %v191
    %v262 = vtanh.pop %v196
    %v263 = vtanh.pop %v201
    %v264 = vtanh.pop %v206
    %v265 = vtanh.pop %v211
    %v266 = vtanh.pop %v216
    %v267 = vtanh.pop %v221
    %v268 = vtanh.pop %v226
    %v269 = vtanh.pop %v231
    %v270 = vtanh.pop %v236
    %v271 = vtanh.pop %v241
    %v272 = vtanh.pop %v246
    %v273 = vtanh.pop %v251
    %v274 = vtanh.pop %v256
    %v275 = vld [vmem:[#allocation2] sm:$0xff]
    %v276 = vld [vmem:[#allocation2 + $0x8] sm:$0xff]
    %v277 = vld [vmem:[#allocation2 + $0x10] sm:$0xff]
    %v278 = vld [vmem:[#allocation2 + $0x18] sm:$0xff]
    %v279 = vld [vmem:[#allocation2 + $0x20] sm:$0xff]
    %v280 = vld [vmem:[#allocation2 + $0x28] sm:$0xff]
    %v281 = vld [vmem:[#allocation2 + $0x30] sm:$0xff]
    %v282 = vld [vmem:[#allocation2 + $0x38] sm:$0xff]
    %v283 = vld [vmem:[#allocation2 + $0x40] sm:$0xff]
    %v284 = vld [vmem:[#allocation2 + $0x48] sm:$0xff]
    %v285 = vld [vmem:[#allocation2 + $0x50] sm:$0xff]
    %v286 = vld [vmem:[#allocation2 + $0x58] sm:$0xff]
    %v287 = vld [vmem:[#allocation2 + $0x60] sm:$0xff]
    %v288 = vld [vmem:[#allocation2 + $0x68] sm:$0xff]
    %v289 = vld [vmem:[#allocation2 + $0x70] sm:$0xff]
    %v290 = vld [vmem:[#allocation2 + $0x78] sm:$0xff]
    %v291 = vld [vmem:[%s4] sm:$0x1]
    %v293 = vlaneseq
    %v294 = vshrl.u32 %v293, 7
    %v295 = vsub.s32 0, %v294
    %v296 = vrot.slane %v291, %v295
    %298 = vmatprep.subr.mxu0 0.0
    %299 = vmatpush1.msra.mxu0 %v275
    %300 = vmatprep.subr.mxu0 0.0
    %301 = vmatpush1.msra.mxu0 %v276
    %302 = vmatprep.subr.mxu0 0.0
    %303 = vmatpush1.msra.mxu0 %v277
    %304 = vmatprep.subr.mxu0 0.0
    %305 = vmatpush1.msra.mxu0 %v278
    %306 = vmatprep.subr.mxu0 0.0
    %307 = vmatpush1.msra.mxu0 %v279
    %308 = vmatprep.subr.mxu0 0.0
    %309 = vmatpush1.msra.mxu0 %v280
    %310 = vmatprep.subr.mxu0 0.0
    %311 = vmatpush1.msra.mxu0 %v281
    %312 = vmatprep.subr.mxu0 0.0
    %313 = vmatpush1.msra.mxu0 %v282
    %314 = vmatprep.subr.mxu0 0.0
    %315 = vmatpush1.msra.mxu0 %v283
    %316 = vmatprep.subr.mxu0 0.0
    %317 = vmatpush1.msra.mxu0 %v284
    %318 = vmatprep.subr.mxu0 0.0
    %319 = vmatpush1.msra.mxu0 %v285
    %320 = vmatprep.subr.mxu0 0.0
    %321 = vmatpush1.msra.mxu0 %v286
    %322 = vmatprep.subr.mxu0 0.0
    %323 = vmatpush1.msra.mxu0 %v287
    %324 = vmatprep.subr.mxu0 0.0
    %325 = vmatpush1.msra.mxu0 %v288
    %326 = vmatprep.subr.mxu0 0.0
    %327 = vmatpush1.msra.mxu0 %v289
    %328 = vmatprep.subr.mxu0 0.0
    %329 = vmatpush1.msra.mxu0 %v290
    %330 = vmatprep.subr.mxu0 0.0
    %331 = vmatpush1.msra.mxu0 0.0
    %332 = vmatprep.subr.mxu0 0.0
    %333 = vmatpush1.msra.mxu0 0.0
    %334 = vmatprep.subr.mxu0 0.0
    %335 = vmatpush1.msra.mxu0 0.0
    %336 = vmatprep.subr.mxu0 0.0
    %337 = vmatpush1.msra.mxu0 0.0
    %338 = vmatprep.subr.mxu0 0.0
    %339 = vmatpush1.msra.mxu0 0.0
    %340 = vmatprep.subr.mxu0 0.0
    %341 = vmatpush1.msra.mxu0 0.0
    %342 = vmatprep.subr.mxu0 0.0
    %343 = vmatpush1.msra.mxu0 0.0
    %344 = vmatprep.subr.mxu0 0.0
    %345 = vmatpush1.msra.mxu0 0.0
    %346 = vmatprep.subr.mxu0 0.0
    %347 = vmatpush1.msra.mxu0 0.0
    %348 = vmatprep.subr.mxu0 0.0
    %349 = vmatpush1.msra.mxu0 0.0
    %350 = vmatprep.subr.mxu0 0.0
    %351 = vmatpush1.msra.mxu0 0.0
    %352 = vmatprep.subr.mxu0 0.0
    %353 = vmatpush1.msra.mxu0 0.0
    %354 = vmatprep.subr.mxu0 0.0
    %355 = vmatpush1.msra.mxu0 0.0
    %356 = vmatprep.subr.mxu0 0.0
    %357 = vmatpush1.msra.mxu0 0.0
    %358 = vmatprep.subr.mxu0 0.0
    %359 = vmatpush1.msra.mxu0 0.0
    %360 = vmatprep.subr.mxu0 0.0
    %361 = vmatpush1.msra.mxu0 0.0
    %362 = vmatprep.mubr.f32.mxu0 0.0
    %363 = vmatmul.mubr.f32.gmra.mrb[0].mxu0 %v259
    %v364 = vpop.f32.mrb[0].mxu0
    %v365 = vadd.f32 %v296, %v364
    %v366 = vpop.f32.mrb[0].mxu0
    %367 = vmatprep.mubr.f32.mxu0 0.0
    %368 = vmatmul.mubr.f32.gmra.mrb[0].mxu0 %v260
    %v369 = vpop.f32.mrb[0].mxu0
    %v370 = vadd.f32 %v296, %v369
    %v371 = vpop.f32.mrb[0].mxu0
    %372 = vmatprep.mubr.f32.mxu0 0.0
    %373 = vmatmul.mubr.f32.gmra.mrb[0].mxu0 %v261
    %v374 = vpop.f32.mrb[0].mxu0
    %v375 = vadd.f32 %v296, %v374
    %v376 = vpop.f32.mrb[0].mxu0
    %377 = vmatprep.mubr.f32.mxu0 0.0
    %378 = vmatmul.mubr.f32.gmra.mrb[0].mxu0 %v262
    %v379 = vpop.f32.mrb[0].mxu0
    %v380 = vadd.f32 %v296, %v379
    %v381 = vpop.f32.mrb[0].mxu0
    %382 = vmatprep.mubr.f32.mxu0 0.0
    %383 = vmatmul.mubr.f32.gmra.mrb[0].mxu0 %v263
    %v384 = vpop.f32.mrb[0].mxu0
    %v385 = vadd.f32 %v296, %v384
    %v386 = vpop.f32.mrb[0].mxu0
    %387 = vmatprep.mubr.f32.mxu0 0.0
    %388 = vmatmul.mubr.f32.gmra.mrb[0].mxu0 %v264
    %v389 = vpop.f32.mrb[0].mxu0
    %v390 = vadd.f32 %v296, %v389
    %v391 = vpop.f32.mrb[0].mxu0
    %392 = vmatprep.mubr.f32.mxu0 0.0
    %393 = vmatmul.mubr.f32.gmra.mrb[0].mxu0 %v265
    %v394 = vpop.f32.mrb[0].mxu0
    %v395 = vadd.f32 %v296, %v394
    %v396 = vpop.f32.mrb[0].mxu0
    %397 = vmatprep.mubr.f32.mxu0 0.0
    %398 = vmatmul.mubr.f32.gmra.mrb[0].mxu0 %v266
    %v399 = vpop.f32.mrb[0].mxu0
    %v400 = vadd.f32 %v296, %v399
    %v401 = vpop.f32.mrb[0].mxu0
    %402 = vmatprep.mubr.f32.mxu0 0.0
    %403 = vmatmul.mubr.f32.gmra.mrb[0].mxu0 %v267
    %v404 = vpop.f32.mrb[0].mxu0
    %v405 = vadd.f32 %v296, %v404
    %v406 = vpop.f32.mrb[0].mxu0
    %407 = vmatprep.mubr.f32.mxu0 0.0
    %408 = vmatmul.mubr.f32.gmra.mrb[0].mxu0 %v268
    %v409 = vpop.f32.mrb[0].mxu0
    %v410 = vadd.f32 %v296, %v409
    %v411 = vpop.f32.mrb[0].mxu0
    %412 = vmatprep.mubr.f32.mxu0 0.0
    %413 = vmatmul.mubr.f32.gmra.mrb[0].mxu0 %v269
    %v414 = vpop.f32.mrb[0].mxu0
    %v415 = vadd.f32 %v296, %v414
    %v416 = vpop.f32.mrb[0].mxu0
    %417 = vmatprep.mubr.f32.mxu0 0.0
    %418 = vmatmul.mubr.f32.gmra.mrb[0].mxu0 %v270
    %v419 = vpop.f32.mrb[0].mxu0
    %v420 = vadd.f32 %v296, %v419
    %v421 = vpop.f32.mrb[0].mxu0
    %422 = vmatprep.mubr.f32.mxu0 0.0
    %423 = vmatmul.mubr.f32.gmra.mrb[0].mxu0 %v271
    %v424 = vpop.f32.mrb[0].mxu0
    %v425 = vadd.f32 %v296, %v424
    %v426 = vpop.f32.mrb[0].mxu0
    %427 = vmatprep.mubr.f32.mxu0 0.0
    %428 = vmatmul.mubr.f32.gmra.mrb[0].mxu0 %v272
    %v429 = vpop.f32.mrb[0].mxu0
    %v430 = vadd.f32 %v296, %v429
    %v431 = vpop.f32.mrb[0].mxu0
    %432 = vmatprep.mubr.f32.mxu0 0.0
    %433 = vmatmul.mubr.f32.gmra.mrb[0].mxu0 %v273
    %v434 = vpop.f32.mrb[0].mxu0
    %v435 = vadd.f32 %v296, %v434
    %v436 = vpop.f32.mrb[0].mxu0
    %437 = vmatprep.mubr.f32.mxu0 0.0
    %438 = vmatmul.mubr.f32.gmra.mrb[0].mxu0 %v274
    %v439 = vpop.f32.mrb[0].mxu0
    %v440 = vadd.f32 %v296, %v439
    %v441 = vpop.f32.mrb[0].mxu0
    %442 = vdwg.mxu0
    %v443 = vtanh.pop %v365
    %v444 = vtanh.pop %v370
    %v445 = vtanh.pop %v375
    %v446 = vtanh.pop %v380
    %v447 = vtanh.pop %v385
    %v448 = vtanh.pop %v390
    %v449 = vtanh.pop %v395
    %v450 = vtanh.pop %v400
    %v451 = vtanh.pop %v405
    %v452 = vtanh.pop %v410
    %v453 = vtanh.pop %v415
    %v454 = vtanh.pop %v420
    %v455 = vtanh.pop %v425
    %v456 = vtanh.pop %v430
    %v457 = vtanh.pop %v435
    %v458 = vtanh.pop %v440
    %s459 = scalar_lea.vmem [#allocation2], 128
    %v460 = vld [vmem:[%s459] sm:$0xff]
    %v461 = vld [vmem:[%s459 + $0x8] sm:$0xff]
    %v462 = vld [vmem:[%s459 + $0x10] sm:$0xff]
    %v463 = vld [vmem:[%s459 + $0x18] sm:$0xff]
    %v464 = vld [vmem:[%s459 + $0x20] sm:$0xff]
    %v465 = vld [vmem:[%s459 + $0x28] sm:$0xff]
    %v466 = vld [vmem:[%s459 + $0x30] sm:$0xff]
    %v467 = vld [vmem:[%s459 + $0x38] sm:$0xff]
    %v468 = vld [vmem:[%s459 + $0x40] sm:$0xff]
    %v469 = vld [vmem:[%s459 + $0x48] sm:$0xff]
    %v470 = vld [vmem:[%s459 + $0x50] sm:$0xff]
    %v471 = vld [vmem:[%s459 + $0x58] sm:$0xff]
    %v472 = vld [vmem:[%s459 + $0x60] sm:$0xff]
    %v473 = vld [vmem:[%s459 + $0x68] sm:$0xff]
    %v474 = vld [vmem:[%s459 + $0x70] sm:$0xff]
    %v475 = vld [vmem:[%s459 + $0x78] sm:$0xff]
    %s476 = scalar_lea.vmem %s4, 1
    %v477 = vld [vmem:[%s476] sm:$0x1]
    %v479 = vlaneseq
    %v480 = vshrl.u32 %v479, 7
    %v481 = vsub.s32 0, %v480
    %v482 = vrot.slane %v477, %v481
    %484 = vmatprep.subr.mxu0 0.0
    %485 = vmatpush1.msra.mxu0 %v460
    %486 = vmatprep.subr.mxu0 0.0
    %487 = vmatpush1.msra.mxu0 %v461
    %488 = vmatprep.subr.mxu0 0.0
    %489 = vmatpush1.msra.mxu0 %v462
    %490 = vmatprep.subr.mxu0 0.0
    %491 = vmatpush1.msra.mxu0 %v463
    %492 = vmatprep.subr.mxu0 0.0
    %493 = vmatpush1.msra.mxu0 %v464
    %494 = vmatprep.subr.mxu0 0.0
    %495 = vmatpush1.msra.mxu0 %v465
    %496 = vmatprep.subr.mxu0 0.0
    %497 = vmatpush1.msra.mxu0 %v466
    %498 = vmatprep.subr.mxu0 0.0
    %499 = vmatpush1.msra.mxu0 %v467
    %500 = vmatprep.subr.mxu0 0.0
    %501 = vmatpush1.msra.mxu0 %v468
    %502 = vmatprep.subr.mxu0 0.0
    %503 = vmatpush1.msra.mxu0 %v469
    %504 = vmatprep.subr.mxu0 0.0
    %505 = vmatpush1.msra.mxu0 %v470
    %506 = vmatprep.subr.mxu0 0.0
    %507 = vmatpush1.msra.mxu0 %v471
    %508 = vmatprep.subr.mxu0 0.0
    %509 = vmatpush1.msra.mxu0 %v472
    %510 = vmatprep.subr.mxu0 0.0
    %511 = vmatpush1.msra.mxu0 %v473
    %512 = vmatprep.subr.mxu0 0.0
    %513 = vmatpush1.msra.mxu0 %v474
    %514 = vmatprep.subr.mxu0 0.0
    %515 = vmatpush1.msra.mxu0 %v475
    %516 = vmatprep.subr.mxu0 0.0
    %517 = vmatpush1.msra.mxu0 0.0
    %518 = vmatprep.subr.mxu0 0.0
    %519 = vmatpush1.msra.mxu0 0.0
    %520 = vmatprep.subr.mxu0 0.0
    %521 = vmatpush1.msra.mxu0 0.0
    %522 = vmatprep.subr.mxu0 0.0
    %523 = vmatpush1.msra.mxu0 0.0
    %524 = vmatprep.subr.mxu0 0.0
    %525 = vmatpush1.msra.mxu0 0.0
    %526 = vmatprep.subr.mxu0 0.0
    %527 = vmatpush1.msra.mxu0 0.0
    %528 = vmatprep.subr.mxu0 0.0
    %529 = vmatpush1.msra.mxu0 0.0
    %530 = vmatprep.subr.mxu0 0.0
    %531 = vmatpush1.msra.mxu0 0.0
    %532 = vmatprep.subr.mxu0 0.0
    %533 = vmatpush1.msra.mxu0 0.0
    %534 = vmatprep.subr.mxu0 0.0
    %535 = vmatpush1.msra.mxu0 0.0
    %536 = vmatprep.subr.mxu0 0.0
    %537 = vmatpush1.msra.mxu0 0.0
    %538 = vmatprep.subr.mxu0 0.0
    %539 = vmatpush1.msra.mxu0 0.0
    %540 = vmatprep.subr.mxu0 0.0
    %541 = vmatpush1.msra.mxu0 0.0
    %542 = vmatprep.subr.mxu0 0.0
    %543 = vmatpush1.msra.mxu0 0.0
    %544 = vmatprep.subr.mxu0 0.0
    %545 = vmatpush1.msra.mxu0 0.0
    %546 = vmatprep.subr.mxu0 0.0
    %547 = vmatpush1.msra.mxu0 0.0
    %548 = vmatprep.mubr.f32.mxu0 0.0
    %549 = vmatmul.mubr.f32.gmra.mrb[0].mxu0 %v443
    %v550 = vpop.f32.mrb[0].mxu0
    %v551 = vadd.f32 %v482, %v550
    %v552 = vpop.f32.mrb[0].mxu0
    %553 = vmatprep.mubr.f32.mxu0 0.0
    %554 = vmatmul.mubr.f32.gmra.mrb[0].mxu0 %v444
    %v555 = vpop.f32.mrb[0].mxu0
    %v556 = vadd.f32 %v482, %v555
    %v557 = vpop.f32.mrb[0].mxu0
    %558 = vmatprep.mubr.f32.mxu0 0.0
    %559 = vmatmul.mubr.f32.gmra.mrb[0].mxu0 %v445
    %v560 = vpop.f32.mrb[0].mxu0
    %v561 = vadd.f32 %v482, %v560
    %v562 = vpop.f32.mrb[0].mxu0
    %563 = vmatprep.mubr.f32.mxu0 0.0
    %564 = vmatmul.mubr.f32.gmra.mrb[0].mxu0 %v446
    %v565 = vpop.f32.mrb[0].mxu0
    %v566 = vadd.f32 %v482, %v565
    %v567 = vpop.f32.mrb[0].mxu0
    %568 = vmatprep.mubr.f32.mxu0 0.0
    %569 = vmatmul.mubr.f32.gmra.mrb[0].mxu0 %v447
    %v570 = vpop.f32.mrb[0].mxu0
    %v571 = vadd.f32 %v482, %v570
    %v572 = vpop.f32.mrb[0].mxu0
    %573 = vmatprep.mubr.f32.mxu0 0.0
    %574 = vmatmul.mubr.f32.gmra.mrb[0].mxu0 %v448
    %v575 = vpop.f32.mrb[0].mxu0
    %v576 = vadd.f32 %v482, %v575
    %v577 = vpop.f32.mrb[0].mxu0
    %578 = vmatprep.mubr.f32.mxu0 0.0
    %579 = vmatmul.mubr.f32.gmra.mrb[0].mxu0 %v449
    %v580 = vpop.f32.mrb[0].mxu0
    %v581 = vadd.f32 %v482, %v580
    %v582 = vpop.f32.mrb[0].mxu0
    %583 = vmatprep.mubr.f32.mxu0 0.0
    %584 = vmatmul.mubr.f32.gmra.mrb[0].mxu0 %v450
    %v585 = vpop.f32.mrb[0].mxu0
    %v586 = vadd.f32 %v482, %v585
    %v587 = vpop.f32.mrb[0].mxu0
    %588 = vmatprep.mubr.f32.mxu0 0.0
    %589 = vmatmul.mubr.f32.gmra.mrb[0].mxu0 %v451
    %v590 = vpop.f32.mrb[0].mxu0
    %v591 = vadd.f32 %v482, %v590
    %v592 = vpop.f32.mrb[0].mxu0
    %593 = vmatprep.mubr.f32.mxu0 0.0
    %594 = vmatmul.mubr.f32.gmra.mrb[0].mxu0 %v452
    %v595 = vpop.f32.mrb[0].mxu0
    %v596 = vadd.f32 %v482, %v595
    %v597 = vpop.f32.mrb[0].mxu0
    %598 = vmatprep.mubr.f32.mxu0 0.0
    %599 = vmatmul.mubr.f32.gmra.mrb[0].mxu0 %v453
    %v600 = vpop.f32.mrb[0].mxu0
    %v601 = vadd.f32 %v482, %v600
    %v602 = vpop.f32.mrb[0].mxu0
    %603 = vmatprep.mubr.f32.mxu0 0.0
    %604 = vmatmul.mubr.f32.gmra.mrb[0].mxu0 %v454
    %v605 = vpop.f32.mrb[0].mxu0
    %v606 = vadd.f32 %v482, %v605
    %v607 = vpop.f32.mrb[0].mxu0
    %608 = vmatprep.mubr.f32.mxu0 0.0
    %609 = vmatmul.mubr.f32.gmra.mrb[0].mxu0 %v455
    %v610 = vpop.f32.mrb[0].mxu0
    %v611 = vadd.f32 %v482, %v610
    %v612 = vpop.f32.mrb[0].mxu0
    %613 = vmatprep.mubr.f32.mxu0 0.0
    %614 = vmatmul.mubr.f32.gmra.mrb[0].mxu0 %v456
    %v615 = vpop.f32.mrb[0].mxu0
    %v616 = vadd.f32 %v482, %v615
    %v617 = vpop.f32.mrb[0].mxu0
    %618 = vmatprep.mubr.f32.mxu0 0.0
    %619 = vmatmul.mubr.f32.gmra.mrb[0].mxu0 %v457
    %v620 = vpop.f32.mrb[0].mxu0
    %v621 = vadd.f32 %v482, %v620
    %v622 = vpop.f32.mrb[0].mxu0
    %623 = vmatprep.mubr.f32.mxu0 0.0
    %624 = vmatmul.mubr.f32.gmra.mrb[0].mxu0 %v458
    %v625 = vpop.f32.mrb[0].mxu0
    %v626 = vadd.f32 %v482, %v625
    %v627 = vpop.f32.mrb[0].mxu0
    %628 = vdwg.mxu0
    %v629 = vtanh.pop %v551
    %v630 = vtanh.pop %v556
    %v631 = vtanh.pop %v561
    %v632 = vtanh.pop %v566
    %v633 = vtanh.pop %v571
    %v634 = vtanh.pop %v576
    %v635 = vtanh.pop %v581
    %v636 = vtanh.pop %v586
    %v637 = vtanh.pop %v591
    %v638 = vtanh.pop %v596
    %v639 = vtanh.pop %v601
    %v640 = vtanh.pop %v606
    %v641 = vtanh.pop %v611
    %v642 = vtanh.pop %v616
    %v643 = vtanh.pop %v621
    %v644 = vtanh.pop %v626
    %v645 = vld [vmem:[%s5] sm:$0xff]
    %v646 = vld [vmem:[%s6] sm:$0xff]
    %648 = vset.pattern.permute.xlu0 0
    %649 = vperm.xlu0 %648, %v646
    %v650 = vpop.permute.xlu0 %649
    %652 = vmatprep.subr.mxu0 0.0
    %653 = vmatpush1.xpose.msra.mxu0 %v629
    %654 = vmatprep.subr.mxu0 0.0
    %655 = vmatpush1.xpose.msra.mxu0 %v630
    %656 = vmatprep.subr.mxu0 0.0
    %657 = vmatpush1.xpose.msra.mxu0 %v631
    %658 = vmatprep.subr.mxu0 0.0
    %659 = vmatpush1.xpose.msra.mxu0 %v632
    %660 = vmatprep.subr.mxu0 0.0
    %661 = vmatpush1.xpose.msra.mxu0 %v633
    %662 = vmatprep.subr.mxu0 0.0
    %663 = vmatpush1.xpose.msra.mxu0 %v634
    %664 = vmatprep.subr.mxu0 0.0
    %665 = vmatpush1.xpose.msra.mxu0 %v635
    %666 = vmatprep.subr.mxu0 0.0
    %667 = vmatpush1.xpose.msra.mxu0 %v636
    %668 = vmatprep.subr.mxu0 0.0
    %669 = vmatpush1.xpose.msra.mxu0 %v637
    %670 = vmatprep.subr.mxu0 0.0
    %671 = vmatpush1.xpose.msra.mxu0 %v638
    %672 = vmatprep.subr.mxu0 0.0
    %673 = vmatpush1.xpose.msra.mxu0 %v639
    %674 = vmatprep.subr.mxu0 0.0
    %675 = vmatpush1.xpose.msra.mxu0 %v640
    %676 = vmatprep.subr.mxu0 0.0
    %677 = vmatpush1.xpose.msra.mxu0 %v641
    %678 = vmatprep.subr.mxu0 0.0
    %679 = vmatpush1.xpose.msra.mxu0 %v642
    %680 = vmatprep.subr.mxu0 0.0
    %681 = vmatpush1.xpose.msra.mxu0 %v643
    %682 = vmatprep.subr.mxu0 0.0
    %683 = vmatpush1.xpose.msra.mxu0 %v644
    %684 = vmatprep.subr.mxu0 0.0
    %685 = vmatpush1.xpose.msra.mxu0 0.0
    %686 = vmatprep.subr.mxu0 0.0
    %687 = vmatpush1.xpose.msra.mxu0 0.0
    %688 = vmatprep.subr.mxu0 0.0
    %689 = vmatpush1.xpose.msra.mxu0 0.0
    %690 = vmatprep.subr.mxu0 0.0
    %691 = vmatpush1.xpose.msra.mxu0 0.0
    %692 = vmatprep.subr.mxu0 0.0
    %693 = vmatpush1.xpose.msra.mxu0 0.0
    %694 = vmatprep.subr.mxu0 0.0
    %695 = vmatpush1.xpose.msra.mxu0 0.0
    %696 = vmatprep.subr.mxu0 0.0
    %697 = vmatpush1.xpose.msra.mxu0 0.0
    %698 = vmatprep.subr.mxu0 0.0
    %699 = vmatpush1.xpose.msra.mxu0 0.0
    %700 = vmatprep.subr.mxu0 0.0
    %701 = vmatpush1.xpose.msra.mxu0 0.0
    %702 = vmatprep.subr.mxu0 0.0
    %703 = vmatpush1.xpose.msra.mxu0 0.0
    %704 = vmatprep.subr.mxu0 0.0
    %705 = vmatpush1.xpose.msra.mxu0 0.0
    %706 = vmatprep.subr.mxu0 0.0
    %707 = vmatpush1.xpose.msra.mxu0 0.0
    %708 = vmatprep.subr.mxu0 0.0
    %709 = vmatpush1.xpose.msra.mxu0 0.0
    %710 = vmatprep.subr.mxu0 0.0
    %711 = vmatpush1.xpose.msra.mxu0 0.0
    %712 = vmatprep.subr.mxu0 0.0
    %713 = vmatpush1.xpose.msra.mxu0 0.0
    %714 = vmatprep.subr.mxu0 0.0
    %715 = vmatpush1.xpose.msra.mxu0 0.0
    %716 = vmatprep.mubr.f32.mxu0 0.0
    %717 = vmatmul.mubr.f32.gmra.mrb[0].mxu0 %v645
    %v718 = vpop.f32.mrb[0].mxu0
    %v719 = vadd.f32 %v650, %v718
    %v720 = vpop.f32.mrb[0].mxu0
    %721 = vdwg.mxu0
    %722 = vst [vmem:[#allocation5] sm:$0xff] %v719
    // Predicated region
    $region34: #{tpu_custom_call.1} parent=1 // pred_check
      _
    $region35: #{tpu_custom_call.1} parent=1 // pred_check_branch
      %724 = sbr.rel (0) target = $region37
    $region36: #{tpu_custom_call.1} parent=1 // pred_region
      %s726 = ssub.s32 128, 128
      %727 = vsyncadd [#allocation4], %s726
      %s729 = sshll.u32 [#allocation5], 4
      %s730 = int_to_ptr.vmem [resolvable:$true] %s729
      %732 = dma.vmem_to_hbm [thread:$0]  %s730, 128, %s7, [#allocation4]
    $region37: #{tpu_custom_call.1} parent=1 // pred_fallthru
      _
    // Predicated region
    $region38: #{tpu_custom_call.1} parent=1 // pred_check
      _
    $region39: #{tpu_custom_call.1} parent=1 // pred_check_branch
      %734 = sbr.rel (0) target = $region41
    $region40: #{tpu_custom_call.1} parent=1 // pred_region
      %735 = dma.done [#allocation4], 128
    $region41: #{tpu_custom_call.1} parent=1 // pred_fallthru
      _
    %736 = vsyncpa [#allocation3], 1
    %737 = vsyncpa [#allocation4], 1

</llo_original>
